<compile_context>
chip_gen: v5e
topology: v5e:2x2
jax: 0.10.0
libtpu: 0.0.40
codegen_flags: <defaults>
</compile_context>

<pallas_src>
import functools
import math

import jax
import jax.numpy as jnp
from jax.experimental import pallas as pl
from jax.experimental.pallas import tpu as pltpu

# sigmoid_mod(z, 10) = 10 / (1 + 10*exp(-z)) = 5 * (1 + tanh(z/2 - ln(10)/2))
_HALF_LOG10 = 0.5 * math.log(10.0)


def _round_up(x, m):
    return ((x + m - 1) // m) * m


def _policy_net_kernel(x_ref, w_ref, b_ref, o_ref, *, ni_pad, feat, out_feat):
    """Fused 3-layer MLP on one batch tile.

    x_ref: (TB, ni_pad)              bf16  state tile (zero-padded features)
    w_ref: (ni_pad + 2*feat, slab_w) bf16  packed [w1; w2; w3], zero-padded
    b_ref: (8, slab_w)               f32   rows 0/1/2 hold b1/b2/b3
    o_ref: (TB, out_feat)            f32   lane-dense output tile
    """
    x = x_ref[...]                                          # (TB, ni_pad) bf16

    w1 = w_ref[0:ni_pad, 0:feat]                            # (ni_pad, feat)
    w2 = w_ref[ni_pad:ni_pad + feat, 0:feat]                # (feat, feat)
    w3 = w_ref[ni_pad + feat:ni_pad + 2 * feat, 0:out_feat]  # (feat, out_feat)

    # layer 1: Linear + ReLU (f32 accumulate/epilogue, bf16 into next MXU op)
    h = jnp.dot(x, w1, preferred_element_type=jnp.float32) + b_ref[0:1, 0:feat]
    h = jnp.maximum(h, 0.0).astype(jnp.bfloat16)

    # layer 2: Linear + ReLU
    h = jnp.dot(h, w2, preferred_element_type=jnp.float32) + b_ref[1:2, 0:feat]
    h = jnp.maximum(h, 0.0).astype(jnp.bfloat16)

    # layer 3: Linear + sigmoid_mod(., 10) via a single tanh (one EUP push).
    z = (jnp.dot(h, w3, preferred_element_type=jnp.float32)
         + b_ref[2:3, 0:out_feat])
    o_ref[...] = (5.0 * (1.0 + jnp.tanh(0.5 * z - _HALF_LOG10))).astype(
        o_ref.dtype)


def pack_params(params):
    """Packs (in,out)-layout weights/biases into two padded operands.

    w_slab is bf16 (MXU-native), b_slab stays f32. Do this once; reuse.
    """
    w1, b1 = params["w1"], params["b1"]
    w2, b2 = params["w2"], params["b2"]
    w3, b3 = params["w3"], params["b3"]

    num_inputs, hidden = w1.shape
    num_actions = w3.shape[1]
    ni_pad = _round_up(num_inputs, 16)         # bf16 sublane packing
    feat = _round_up(hidden, 128)              # hidden lane width
    out_feat = _round_up(num_actions, 128)     # output lane width (decoupled)
    slab_w = max(feat, out_feat)

    def pad2(a, rows, cols):
        return jnp.pad(a, ((0, rows - a.shape[0]), (0, cols - a.shape[1])))

    w_slab = jnp.concatenate(
        [pad2(w1, ni_pad, slab_w), pad2(w2, feat, slab_w),
         pad2(w3, feat, slab_w)], axis=0).astype(jnp.bfloat16)

    b_slab = jnp.zeros((8, slab_w), jnp.float32)
    b_slab = b_slab.at[0, :hidden].set(b1.astype(jnp.float32))
    b_slab = b_slab.at[1, :hidden].set(b2.astype(jnp.float32))
    b_slab = b_slab.at[2, :num_actions].set(b3.astype(jnp.float32))

    meta = dict(num_inputs=num_inputs, hidden=hidden, num_actions=num_actions,
                ni_pad=ni_pad, feat=feat, out_feat=out_feat)
    return w_slab, b_slab, meta


def _choose_batch_tiling(B, block_batch):
    """Balanced batch tiles: minimal zero-row padding, >=2 tiles when large."""
    n_tiles = -(-B // block_batch)
    # v7x megacore: make sure the "parallel" axis has at least 2 tiles once the
    # batch is big enough to amortize the extra ~0.35us grid step (harmless on
    # single-TC v5e/v6e).
    if n_tiles == 1 and B > 256:
        n_tiles = 2
    tb = _round_up(-(-B // n_tiles), 16)        # bf16 sublane multiple
    return tb, n_tiles, tb * n_tiles


def policy_network_forward(state, packed, *, block_batch=1024,
                           out_dtype=jnp.float32):
    """Batch-tiled fused forward pass. state: (B, num_inputs) float."""
    w_slab, b_slab, meta = packed
    ni_pad, feat, out_feat = meta["ni_pad"], meta["feat"], meta["out_feat"]
    num_actions = meta["num_actions"]

    B, ni = state.shape
    assert ni == meta["num_inputs"], (ni, meta["num_inputs"])

    tb, n_tiles, b_pad = _choose_batch_tiling(B, block_batch)

    x = state.astype(jnp.bfloat16)              # MXU-native input
    if b_pad != B or ni_pad != ni:              # skip the pad op when unneeded
        x = jnp.pad(x, ((0, b_pad - B), (0, ni_pad - ni)))

    kernel = functools.partial(_policy_net_kernel, ni_pad=ni_pad, feat=feat,
                               out_feat=out_feat)

    out = pl.pallas_call(
        kernel,
        out_shape=jax.ShapeDtypeStruct((b_pad, out_feat), out_dtype),
        grid_spec=pltpu.PrefetchScalarGridSpec(
            num_scalar_prefetch=0,
            grid=(n_tiles,),
            in_specs=[
                pl.BlockSpec((tb, ni_pad), lambda i: (i, 0)),   # state tile
                # Constant index_maps: weights/biases are DMA'd once and stay
                # VMEM-resident across grid steps. (Could be single-buffered
                # via pipeline_mode, but the saving is only ~100 KB of VMEM.)
                pl.BlockSpec(w_slab.shape, lambda i: (0, 0)),
                pl.BlockSpec(b_slab.shape, lambda i: (0, 0)),
            ],
            out_specs=pl.BlockSpec((tb, out_feat), lambda i: (i, 0)),
        ),
        compiler_params=pltpu.CompilerParams(
            dimension_semantics=("parallel",)),
    )(x, w_slab, b_slab)

    return out[:B, :num_actions]


def init_params(key, num_inputs, num_actions, hidden_size, init_w=0.003):
    """Mirrors the PyTorch module's init; weights stored as (in, out)."""
    k1, k2, k3, k4, k5, k6 = jax.random.split(key, 6)
    lim1 = 1.0 / jnp.sqrt(num_inputs)
    lim2 = 1.0 / jnp.sqrt(hidden_size)
    return {
        "w1": jax.random.uniform(k1, (num_inputs, hidden_size), jnp.float32,
                                 -lim1, lim1),
        "b1": jax.random.uniform(k2, (hidden_size,), jnp.float32, -lim1, lim1),
        "w2": jax.random.uniform(k3, (hidden_size, hidden_size), jnp.float32,
                                 -lim2, lim2),
        "b2": jax.random.uniform(k4, (hidden_size,), jnp.float32, -lim2, lim2),
        "w3": jax.random.uniform(k5, (hidden_size, num_actions), jnp.float32,
                                 -init_w, init_w),
        "b3": jax.random.uniform(k6, (num_actions,), jnp.float32,
                                 -init_w, init_w),
    }


def reference_forward(state, params):
    """Exact f32 reference, same math as the PyTorch module."""
    h = jnp.maximum(state @ params["w1"] + params["b1"], 0.0)
    h = jnp.maximum(h @ params["w2"] + params["b2"], 0.0)
    z = h @ params["w3"] + params["b3"]
    return 10.0 / (1.0 + 10.0 * jnp.exp(-z))


def reference_forward_mxu(state, params):
    """Reference mirroring the kernel's MXU semantics (bf16 in, f32 acc)."""
    def bdot(a, w):
        return jnp.dot(a.astype(jnp.bfloat16), w.astype(jnp.bfloat16),
                       preferred_element_type=jnp.float32)
    h = jnp.maximum(bdot(state, params["w1"]) + params["b1"], 0.0)
    h = jnp.maximum(bdot(h, params["w2"]) + params["b2"], 0.0)
    z = bdot(h, params["w3"]) + params["b3"]
    return 5.0 * (1.0 + jnp.tanh(0.5 * z - _HALF_LOG10))


if __name__ == "__main__":
    num_inputs, num_actions, hidden_size = 4, 2, 32
    batch = 2

    key = jax.random.PRNGKey(0)
    k_state, k_params, k_big = jax.random.split(key, 3)

    params = init_params(k_params, num_inputs, num_actions, hidden_size)
    packed = pack_params(params)

    # Small batch (typical get_action usage): single 16-row tile.
    state = jax.random.normal(k_state, (batch, num_inputs), jnp.float32)
    out = jax.block_until_ready(policy_network_forward(state, packed))
    assert out.shape == (batch, num_actions), out.shape
    # Tight check vs. a reference that mirrors the kernel's bf16-MXU semantics.
    assert jnp.allclose(out, reference_forward_mxu(state, params),
                        atol=1e-3, rtol=1e-3)
    # Loose sanity check vs. the exact-f32 PyTorch-equivalent math (bf16
    # weights/input quantization is the only remaining deviation).
    assert jnp.allclose(out, reference_forward(state, params),
                        atol=2e-2, rtol=2e-2)

    # Larger ragged batch: exercises 2 grid tiles (v7x megacore) + row padding.
    big_state = jax.random.normal(k_big, (300, num_inputs), jnp.float32)
    big_out = jax.block_until_ready(policy_network_forward(big_state, packed))
    assert big_out.shape == (300, num_actions), big_out.shape
    assert jnp.allclose(big_out, reference_forward_mxu(big_state, params),
                        atol=1e-3, rtol=1e-3)
    assert jnp.allclose(big_out, reference_forward(big_state, params),
                        atol=2e-2, rtol=2e-2)

    print("KERNEL_OK")
</pallas_src>

<mosaic_0001>
module attributes {stable_mosaic.version = 11 : i64} {
  func.func @_policy_net_kernel(%arg0: i32, %arg1: memref<16x16xbf16, #tpu.memory_space<vmem>>, %arg2: memref<272x128xbf16, #tpu.memory_space<vmem>>, %arg3: memref<8x128xf32, #tpu.memory_space<vmem>>, %arg4: memref<16x128xf32, #tpu.memory_space<vmem>>) attributes {dimension_semantics = [#tpu.dimension_semantics<parallel>], iteration_bounds = array<i64: 1>, scalar_prefetch = 0 : i64, scratch_operands = 0 : i64, tpu.core_type = #tpu.core_type<tc>, window_params = [{transform_indices = @transform_0, window_bounds = array<i64: 16, 16>}, {pipeline_mode = #tpu.pipeline_mode<synchronous>, transform_indices = @transform_1, window_bounds = array<i64: 272, 128>}, {pipeline_mode = #tpu.pipeline_mode<synchronous>, transform_indices = @transform_2, window_bounds = array<i64: 8, 128>}, {transform_indices = @transform_3, window_bounds = array<i64: 16, 128>}]} {
    %c0 = arith.constant 0 : index
    %c0_0 = arith.constant 0 : index
    %0 = vector.load %arg1[%c0, %c0_0] : memref<16x16xbf16, #tpu.memory_space<vmem>>, vector<16x16xbf16>
    %c0_1 = arith.constant 0 : index
    %c0_2 = arith.constant 0 : index
    %1 = vector.load %arg2[%c0_1, %c0_2] : memref<272x128xbf16, #tpu.memory_space<vmem>>, vector<16x128xbf16>
    %c16 = arith.constant 16 : index
    %c0_3 = arith.constant 0 : index
    %2 = vector.load %arg2[%c16, %c0_3] : memref<272x128xbf16, #tpu.memory_space<vmem>>, vector<128x128xbf16>
    %c144 = arith.constant 144 : index
    %c0_4 = arith.constant 0 : index
    %3 = vector.load %arg2[%c144, %c0_4] : memref<272x128xbf16, #tpu.memory_space<vmem>>, vector<128x128xbf16>
    %cst = arith.constant dense<0.000000e+00> : vector<16x128xf32>
    %4 = tpu.matmul %0, %1, %cst {dimension_numbers = #tpu.dot_dimension_numbers<[1], [0], [0], [1], [0, 0, 1, 1], [], []>} : vector<16x16xbf16>, vector<16x128xbf16>, vector<16x128xf32> -> vector<16x128xf32>
    %c0_5 = arith.constant 0 : index
    %c0_6 = arith.constant 0 : index
    %5 = vector.load %arg3[%c0_5, %c0_6] : memref<8x128xf32, #tpu.memory_space<vmem>>, vector<1x128xf32>
    %6 = vector.broadcast %5 : vector<1x128xf32> to vector<16x128xf32>
    %7 = arith.addf %4, %6 : vector<16x128xf32>
    %cst_7 = arith.constant 0.000000e+00 : f32
    %8 = vector.broadcast %cst_7 : f32 to vector<16x128xf32>
    %9 = arith.maximumf %7, %8 : vector<16x128xf32>
    %10 = arith.truncf %9 : vector<16x128xf32> to vector<16x128xbf16>
    %cst_8 = arith.constant dense<0.000000e+00> : vector<16x128xf32>
    %11 = tpu.matmul %10, %2, %cst_8 {dimension_numbers = #tpu.dot_dimension_numbers<[1], [0], [0], [1], [0, 0, 1, 1], [], []>} : vector<16x128xbf16>, vector<128x128xbf16>, vector<16x128xf32> -> vector<16x128xf32>
    %c1 = arith.constant 1 : index
    %c0_9 = arith.constant 0 : index
    %12 = vector.load %arg3[%c1, %c0_9] : memref<8x128xf32, #tpu.memory_space<vmem>>, vector<1x128xf32>
    %13 = vector.broadcast %12 : vector<1x128xf32> to vector<16x128xf32>
    %14 = arith.addf %11, %13 : vector<16x128xf32>
    %cst_10 = arith.constant 0.000000e+00 : f32
    %15 = vector.broadcast %cst_10 : f32 to vector<16x128xf32>
    %16 = arith.maximumf %14, %15 : vector<16x128xf32>
    %17 = arith.truncf %16 : vector<16x128xf32> to vector<16x128xbf16>
    %cst_11 = arith.constant dense<0.000000e+00> : vector<16x128xf32>
    %18 = tpu.matmul %17, %3, %cst_11 {dimension_numbers = #tpu.dot_dimension_numbers<[1], [0], [0], [1], [0, 0, 1, 1], [], []>} : vector<16x128xbf16>, vector<128x128xbf16>, vector<16x128xf32> -> vector<16x128xf32>
    %c2 = arith.constant 2 : index
    %c0_12 = arith.constant 0 : index
    %19 = vector.load %arg3[%c2, %c0_12] : memref<8x128xf32, #tpu.memory_space<vmem>>, vector<1x128xf32>
    %20 = vector.broadcast %19 : vector<1x128xf32> to vector<16x128xf32>
    %21 = arith.addf %18, %20 : vector<16x128xf32>
    %cst_13 = arith.constant 5.000000e-01 : f32
    %22 = vector.broadcast %cst_13 : f32 to vector<16x128xf32>
    %23 = arith.mulf %22, %21 : vector<16x128xf32>
    %cst_14 = arith.constant 1.15129256 : f32
    %24 = vector.broadcast %cst_14 : f32 to vector<16x128xf32>
    %25 = arith.subf %23, %24 : vector<16x128xf32>
    %26 = math.tanh %25 : vector<16x128xf32>
    %cst_15 = arith.constant 1.000000e+00 : f32
    %27 = vector.broadcast %cst_15 : f32 to vector<16x128xf32>
    %28 = arith.addf %27, %26 : vector<16x128xf32>
    %cst_16 = arith.constant 5.000000e+00 : f32
    %29 = vector.broadcast %cst_16 : f32 to vector<16x128xf32>
    %30 = arith.mulf %29, %28 : vector<16x128xf32>
    %c0_17 = arith.constant 0 : index
    %c0_18 = arith.constant 0 : index
    %31 = vector.load %arg4[%c0_17, %c0_18] : memref<16x128xf32, #tpu.memory_space<vmem>>, vector<16x128xf32>
    tpu.vector_store %arg4[%c0_17, %c0_18], %30 {strides = array<i32>} : memref<16x128xf32, #tpu.memory_space<vmem>>, vector<16x128xf32>,
    return
  }
  func.func @transform_0(%arg0: i32) -> (i32, i32) {
    %c0_i32 = arith.constant 0 : i32
    %c0_i32_0 = arith.constant 0 : i32
    return %arg0, %c0_i32 : i32, i32
  }
  func.func @transform_1(%arg0: i32) -> (i32, i32) {
    %c0_i32 = arith.constant 0 : i32
    %c0_i32_0 = arith.constant 0 : i32
    %c0_i32_1 = arith.constant 0 : i32
    return %c0_i32, %c0_i32_0 : i32, i32
  }
  func.func @transform_2(%arg0: i32) -> (i32, i32) {
    %c0_i32 = arith.constant 0 : i32
    %c0_i32_0 = arith.constant 0 : i32
    %c0_i32_1 = arith.constant 0 : i32
    return %c0_i32, %c0_i32_0 : i32, i32
  }
  func.func @transform_3(%arg0: i32) -> (i32, i32) {
    %c0_i32 = arith.constant 0 : i32
    %c0_i32_0 = arith.constant 0 : i32
    return %arg0, %c0_i32 : i32, i32
  }
}

</mosaic_0001>

<llo_original>
// kernel: tpu_custom_call.1
$region0: #{tpu_custom_call.1}
  #allocation0 [shape = 'u32[]', space=smem, size = 0x4, offset = 0x4, fixed_abs, tag = 'smem constant byte address 0x4 - core index']
  #allocation1 [shape = 'u32[72,128]{1,0:T(1,128)}', space=vmem, size = 0x9000, scoped, tag = 'internal scratch']
  %s0 = inlined_call_operand.hbm [shape: bf16[16,16], index: 0, kind: input, shape index: {}]
  %s1 = inlined_call_operand.hbm [shape: bf16[272,128], index: 1, kind: input, shape index: {}]
  %s2 = inlined_call_operand.hbm [shape: f32[8,128], index: 2, kind: input, shape index: {}]
  %s3 = inlined_call_operand.hbm [shape: f32[16,128], index: 3, kind: output, shape index: {}]
  %s4 = sld [smem:[#allocation0]]
  $region34: #{tpu_custom_call.1} parent=0
    _
  %s6 = ssub.s32 1, %s4
  %s7 = scalar_select 0, %s6, %s4
  $region1: #{tpu_custom_call.1} parent=0
    #allocation2 [shape = 'u8[4096]{0}', space=vmem, size = 0x1000, scoped, tag = 'input window, operand 0, single buffered']
    #allocation3 [shape = 's32[1]{0}', space=sflag, size = 0x4, scoped, tag = 'scoped memory for tpu_custom_call.1']
    #allocation4 [shape = 's32[1]{0}', space=sflag, size = 0x4, scoped, tag = 'scoped memory for tpu_custom_call.1']
    #allocation5 [shape = 'u8[69632]{0}', space=vmem, size = 0x11000, scoped, tag = 'input window, operand 1, single buffered']
    #allocation6 [shape = 's32[1]{0}', space=sflag, size = 0x4, scoped, tag = 'scoped memory for tpu_custom_call.1']
    #allocation7 [shape = 'u8[4096]{0}', space=vmem, size = 0x1000, scoped, tag = 'input window, operand 2, single buffered']
    #allocation8 [shape = 'u8[8192]{0}', space=vmem, size = 0x2000, scoped, tag = 'output window, operand 0, single buffered']
    %8 = vsyncpa [#allocation3], 0
    %9 = vsyncpa [#allocation6], 0
    %10 = vsyncpa [#allocation4], 0
    // Predicated region
    $region2: #{tpu_custom_call.1} parent=1 // pred_check
      _
    $region3: #{tpu_custom_call.1} parent=1 // pred_check_branch
      %12 = sbr.rel (0) target = $region5
    $region4: #{tpu_custom_call.1} parent=1 // pred_region
      %14 = vsyncadd [#allocation3], 0
      %s15 = sshll.u32 %s0, 4
      %s16 = int_to_ptr.hbm [resolvable:$true] %s15
      %s17 = sshll.u32 [#allocation2], 4
      %s18 = int_to_ptr.vmem [resolvable:$true] %s17
      %23 = dma.hbm_to_vmem [thread:$0]  %s16, 128, %s18, [#allocation3], 64, 64, 4
    $region5: #{tpu_custom_call.1} parent=1 // pred_fallthru
      _
    // Predicated region
    $region6: #{tpu_custom_call.1} parent=1 // pred_check
      _
    $region7: #{tpu_custom_call.1} parent=1 // pred_check_branch
      %25 = sbr.rel (0) target = $region9
    $region8: #{tpu_custom_call.1} parent=1 // pred_region
      %27 = vsyncadd [#allocation6], 0
      %s28 = sshll.u32 %s1, 4
      %s29 = int_to_ptr.hbm [resolvable:$true] %s28
      %s30 = sshll.u32 [#allocation5], 4
      %s31 = int_to_ptr.vmem [resolvable:$true] %s30
      %36 = dma.hbm_to_vmem [thread:$0]  %s29, 2176, %s31, [#allocation6], 64, 64, 4
    $region9: #{tpu_custom_call.1} parent=1 // pred_fallthru
      _
    // Predicated region
    $region10: #{tpu_custom_call.1} parent=1 // pred_check
      _
    $region11: #{tpu_custom_call.1} parent=1 // pred_check_branch
      %38 = sbr.rel (0) target = $region13
    $region12: #{tpu_custom_call.1} parent=1 // pred_region
      %40 = vsyncadd [#allocation6], 0
      %s42 = sshll.u32 %s2, 4
      %s43 = int_to_ptr.hbm [resolvable:$true] %s42
      %s44 = sshll.u32 [#allocation7], 4
      %s45 = int_to_ptr.vmem [resolvable:$true] %s44
      %47 = dma.hbm_to_vmem [thread:$0]  %s43, 128, %s45, [#allocation6]
    $region13: #{tpu_custom_call.1} parent=1 // pred_fallthru
      _
    // Predicated region
    $region14: #{tpu_custom_call.1} parent=1 // pred_check
      _
    $region15: #{tpu_custom_call.1} parent=1 // pred_check_branch
      %49 = sbr.rel (0) target = $region17
    $region16: #{tpu_custom_call.1} parent=1 // pred_region
      %51 = dma.done [#allocation3], 128
    $region17: #{tpu_custom_call.1} parent=1 // pred_fallthru
      _
    // Predicated region
    $region18: #{tpu_custom_call.1} parent=1 // pred_check
      _
    $region19: #{tpu_custom_call.1} parent=1 // pred_check_branch
      %53 = sbr.rel (0) target = $region21
    $region20: #{tpu_custom_call.1} parent=1 // pred_region
      %55 = dma.done [#allocation6], 2176
    $region21: #{tpu_custom_call.1} parent=1 // pred_fallthru
      _
    // Predicated region
    $region22: #{tpu_custom_call.1} parent=1 // pred_check
      _
    $region23: #{tpu_custom_call.1} parent=1 // pred_check_branch
      %57 = sbr.rel (0) target = $region25
    $region24: #{tpu_custom_call.1} parent=1 // pred_region
      %59 = dma.done [#allocation6], 128
    $region25: #{tpu_custom_call.1} parent=1 // pred_fallthru
      _
    %v61 = vld [vmem:[#allocation2] sm:$0xf]
    %v62 = vld [vmem:[#allocation2 + $0x4] sm:$0xf]
    %v63 = vld [vmem:[#allocation5] sm:$0xf]
    %v64 = vld [vmem:[#allocation5 + $0x4] sm:$0xf]
    %v65 = vld [vmem:[#allocation5 + $0x8] sm:$0xf]
    %v66 = vld [vmem:[#allocation5 + $0xc] sm:$0xf]
    %v67 = vld [vmem:[#allocation5 + $0x10] sm:$0xf]
    %v68 = vld [vmem:[#allocation5 + $0x14] sm:$0xf]
    %v69 = vld [vmem:[#allocation5 + $0x18] sm:$0xf]
    %v70 = vld [vmem:[#allocation5 + $0x1c] sm:$0xf]
    %v71 = vld [vmem:[#allocation5 + $0x20] sm:$0xf]
    %v72 = vld [vmem:[#allocation5 + $0x24] sm:$0xf]
    %v73 = vld [vmem:[#allocation5 + $0x28] sm:$0xf]
    %v74 = vld [vmem:[#allocation5 + $0x2c] sm:$0xf]
    %v75 = vld [vmem:[#allocation5 + $0x30] sm:$0xf]
    %v76 = vld [vmem:[#allocation5 + $0x34] sm:$0xf]
    %v77 = vld [vmem:[#allocation5 + $0x38] sm:$0xf]
    %v78 = vld [vmem:[#allocation5 + $0x3c] sm:$0xf]
    %v79 = vld [vmem:[#allocation5 + $0x40] sm:$0xf]
    %v80 = vld [vmem:[#allocation5 + $0x44] sm:$0xf]
    %v81 = vld [vmem:[#allocation5 + $0x48] sm:$0xf]
    %v82 = vld [vmem:[#allocation5 + $0x4c] sm:$0xf]
    %v83 = vld [vmem:[#allocation5 + $0x50] sm:$0xf]
    %v84 = vld [vmem:[#allocation5 + $0x54] sm:$0xf]
    %v85 = vld [vmem:[#allocation5 + $0x58] sm:$0xf]
    %v86 = vld [vmem:[#allocation5 + $0x5c] sm:$0xf]
    %v87 = vld [vmem:[#allocation5 + $0x60] sm:$0xf]
    %v88 = vld [vmem:[#allocation5 + $0x64] sm:$0xf]
    %v89 = vld [vmem:[#allocation5 + $0x68] sm:$0xf]
    %v90 = vld [vmem:[#allocation5 + $0x6c] sm:$0xf]
    %v91 = vld [vmem:[#allocation5 + $0x70] sm:$0xf]
    %v92 = vld [vmem:[#allocation5 + $0x74] sm:$0xf]
    %v93 = vld [vmem:[#allocation5 + $0x78] sm:$0xf]
    %v94 = vld [vmem:[#allocation5 + $0x7c] sm:$0xf]
    %v95 = vld [vmem:[#allocation5 + $0x80] sm:$0xf]
    %v96 = vld [vmem:[#allocation5 + $0x84] sm:$0xf]
    %v97 = vld [vmem:[#allocation7] sm:$0x1]
    %v98 = vperm.slane %v97, 0
    %v101 = vunpack.c.l.b16 %v61
    %v102 = vunpack.c.l.b16 %v62
    %v103 = vpack.c.b16 %v102, %v101
    %v106 = vunpack.c.l.b16 %v63
    %v107 = vunpack.c.l.b16 %v64
    %v108 = vpack.c.b16 %v107, %v106
    %vm110 = vcmask 130048
    %v112 = vsel %vm110, %v103, 0
    %114 = vmatpush.bf16.msra.mxu0 0
    %115 = vmatpush.bf16.msra.mxu0 0
    %116 = vmatpush.bf16.msra.mxu0 0
    %117 = vmatpush.bf16.msra.mxu0 0
    %118 = vmatpush.bf16.msra.mxu0 0
    %119 = vmatpush.bf16.msra.mxu0 0
    %120 = vmatpush.bf16.msra.mxu0 0
    %121 = vmatpush.bf16.msra.mxu0 %v108
    %122 = vmatmul.bf16.gmra.mxu0 %v112
    %v123 = vpop.f32.mrf.mxu0
    %v124 = vadd.f32 %v98, %v123
    %v125 = vpop.f32.mrf.mxu0
    %v126 = vadd.f32 %v98, %v125
    %127 = vdwg.mxu0
    %v128 = vmax.f32 %v124, 0.0
    %v129 = vmax.f32 %v126, 0.0
    %v130 = vpack.c.bf16 %v129, %v128
    %v131 = vld [vmem:[#allocation7 + $0x1] sm:$0x1]
    %v132 = vperm.slane %v131, 0
    %v149 = vunpack.c.l.b16 %v65
    %v150 = vunpack.c.l.b16 %v66
    %v151 = vunpack.c.l.b16 %v67
    %v152 = vunpack.c.l.b16 %v68
    %v153 = vunpack.c.l.b16 %v69
    %v154 = vunpack.c.l.b16 %v70
    %v155 = vunpack.c.l.b16 %v71
    %v156 = vunpack.c.l.b16 %v72
    %v157 = vunpack.c.l.b16 %v73
    %v158 = vunpack.c.l.b16 %v74
    %v159 = vunpack.c.l.b16 %v75
    %v160 = vunpack.c.l.b16 %v76
    %v161 = vunpack.c.l.b16 %v77
    %v162 = vunpack.c.l.b16 %v78
    %v163 = vunpack.c.l.b16 %v79
    %v164 = vunpack.c.l.b16 %v80
    %v165 = vpack.c.b16 %v150, %v149
    %v166 = vpack.c.b16 %v152, %v151
    %v167 = vpack.c.b16 %v154, %v153
    %v168 = vpack.c.b16 %v156, %v155
    %v169 = vpack.c.b16 %v158, %v157
    %v170 = vpack.c.b16 %v160, %v159
    %v171 = vpack.c.b16 %v162, %v161
    %v172 = vpack.c.b16 %v164, %v163
    %181 = vmatpush.bf16.msra.mxu0 %v172
    %182 = vmatpush.bf16.msra.mxu0 %v171
    %183 = vmatpush.bf16.msra.mxu0 %v170
    %184 = vmatpush.bf16.msra.mxu0 %v169
    %185 = vmatpush.bf16.msra.mxu0 %v168
    %186 = vmatpush.bf16.msra.mxu0 %v167
    %187 = vmatpush.bf16.msra.mxu0 %v166
    %188 = vmatpush.bf16.msra.mxu0 %v165
    %189 = vmatmul.bf16.gmra.mxu0 %v130
    %v190 = vpop.f32.mrf.mxu0
    %v191 = vadd.f32 %v132, %v190
    %v192 = vpop.f32.mrf.mxu0
    %v193 = vadd.f32 %v132, %v192
    %194 = vdwg.mxu0
    %v195 = vmax.f32 %v191, 0.0
    %v196 = vmax.f32 %v193, 0.0
    %v197 = vpack.c.bf16 %v196, %v195
    %v198 = vld [vmem:[#allocation7 + $0x2] sm:$0x1]
    %v199 = vperm.slane %v198, 0
    %v216 = vunpack.c.l.b16 %v81
    %v217 = vunpack.c.l.b16 %v82
    %v218 = vunpack.c.l.b16 %v83
    %v219 = vunpack.c.l.b16 %v84
    %v220 = vunpack.c.l.b16 %v85
    %v221 = vunpack.c.l.b16 %v86
    %v222 = vunpack.c.l.b16 %v87
    %v223 = vunpack.c.l.b16 %v88
    %v224 = vunpack.c.l.b16 %v89
    %v225 = vunpack.c.l.b16 %v90
    %v226 = vunpack.c.l.b16 %v91
    %v227 = vunpack.c.l.b16 %v92
    %v228 = vunpack.c.l.b16 %v93
    %v229 = vunpack.c.l.b16 %v94
    %v230 = vunpack.c.l.b16 %v95
    %v231 = vunpack.c.l.b16 %v96
    %v232 = vpack.c.b16 %v217, %v216
    %v233 = vpack.c.b16 %v219, %v218
    %v234 = vpack.c.b16 %v221, %v220
    %v235 = vpack.c.b16 %v223, %v222
    %v236 = vpack.c.b16 %v225, %v224
    %v237 = vpack.c.b16 %v227, %v226
    %v238 = vpack.c.b16 %v229, %v228
    %v239 = vpack.c.b16 %v231, %v230
    %248 = vmatpush.bf16.msra.mxu0 %v239
    %249 = vmatpush.bf16.msra.mxu0 %v238
    %250 = vmatpush.bf16.msra.mxu0 %v237
    %251 = vmatpush.bf16.msra.mxu0 %v236
    %252 = vmatpush.bf16.msra.mxu0 %v235
    %253 = vmatpush.bf16.msra.mxu0 %v234
    %254 = vmatpush.bf16.msra.mxu0 %v233
    %255 = vmatpush.bf16.msra.mxu0 %v232
    %256 = vmatmul.bf16.gmra.mxu0 %v197
    %v257 = vpop.f32.mrf.mxu0
    %v258 = vadd.f32 %v199, %v257
    %v259 = vpop.f32.mrf.mxu0
    %v260 = vadd.f32 %v199, %v259
    %261 = vdwg.mxu0
    %v262 = vmul.f32 %v258, 0.5
    %v263 = vmul.f32 %v260, 0.5
    %v264 = vsub.f32 %v262, 1.1512926
    %v265 = vsub.f32 %v263, 1.1512926
    %v266 = vtanh.pop %v264
    %v267 = vtanh.pop %v265
    %v268 = vadd.f32 %v266, 1.0
    %v269 = vadd.f32 %v267, 1.0
    %v270 = vmul.f32 %v268, 5.0
    %v271 = vmul.f32 %v269, 5.0
    %272 = vst [vmem:[#allocation8] sm:$0xff] %v270
    %273 = vst [vmem:[#allocation8 + $0x8] sm:$0xff] %v271
    // Predicated region
    $region26: #{tpu_custom_call.1} parent=1 // pred_check
      _
    $region27: #{tpu_custom_call.1} parent=1 // pred_check_branch
      %275 = sbr.rel (0) target = $region29
    $region28: #{tpu_custom_call.1} parent=1 // pred_region
      %277 = vsyncadd [#allocation4], 0
      %s278 = sshll.u32 [#allocation8], 4
      %s279 = int_to_ptr.vmem [resolvable:$true] %s278
      %s280 = sshll.u32 %s3, 4
      %s281 = int_to_ptr.hbm [resolvable:$true] %s280
      %286 = dma.vmem_to_hbm [thread:$0]  %s279, 256, %s281, [#allocation4], 128, 128, 8
    $region29: #{tpu_custom_call.1} parent=1 // pred_fallthru
      _
    // Predicated region
    $region30: #{tpu_custom_call.1} parent=1 // pred_check
      _
    $region31: #{tpu_custom_call.1} parent=1 // pred_check_branch
      %288 = sbr.rel (0) target = $region33
    $region32: #{tpu_custom_call.1} parent=1 // pred_region
      %290 = dma.done [#allocation4], 256
    $region33: #{tpu_custom_call.1} parent=1 // pred_fallthru
      _
    %291 = vsyncpa [#allocation3], 1
    %292 = vsyncpa [#allocation6], 1
    %293 = vsyncpa [#allocation4], 1

</llo_original>
